<compile_context>
chip_gen: v6e
topology: v6e:2x2x1
jax: 0.10.0
libtpu: 0.0.40
codegen_flags: <defaults>
</compile_context>

<pallas_src>
import functools

import jax
import jax.numpy as jnp
from jax.experimental import pallas as pl
from jax.experimental.pallas import tpu as pltpu

LANE = 128
SUBLANE = 8


def _round_up(x, m):
    return (x + m - 1) // m * m


def netmid_kernel(x_ref, w1_ref, b1_ref, w2_ref, b2_ref, w3_ref, b3_ref,
                  out_ref):
    # fc1 + ReLU  (bf16 operands into the MXU, f32 accumulation)
    x = x_ref[...]
    z1 = jnp.dot(x.astype(jnp.bfloat16), w1_ref[...],
                 preferred_element_type=jnp.float32) + b1_ref[...]
    z1 = jnp.maximum(z1, 0.0)

    # fc2 with the distribution-sum pre-folded into w2/b2, + ReLU
    z2 = jnp.dot(z1.astype(jnp.bfloat16), w2_ref[...],
                 preferred_element_type=jnp.float32) + b2_ref[...]
    z2 = jnp.maximum(z2, 0.0)

    # fc3 (zero-padded to a lane-dense 128-wide output; no activation)
    out_ref[...] = (jnp.dot(z2.astype(jnp.bfloat16), w3_ref[...],
                            preferred_element_type=jnp.float32)
                    + b3_ref[...]).astype(out_ref.dtype)


def netmid_forward(x, params, *, hidden2_size, distribution_num,
                   block_batch=512):
    """x: (B, input_size) f32. params: dict of (in, out)-layout weights + (1, out) biases."""
    f32, bf16 = jnp.float32, jnp.bfloat16
    H1 = params["w2"].shape[0]
    D, H2 = distribution_num, hidden2_size
    out_size = params["w3"].shape[1]

    # --- host-side parameter prep -------------------------------------------
    w1 = params["w1"].astype(bf16)
    b1 = params["b1"].astype(f32)

    # Fold the distribution sum into fc2 (sum over the D chunks of the output).
    w2_eff = params["w2"].reshape(H1, D, H2).sum(axis=1).astype(bf16)
    b2_eff = params["b2"].reshape(1, D, H2).sum(axis=1).astype(f32)

    # Zero-pad fc3 so the kernel's output store is lane-dense (128-wide).
    out_pad = _round_up(out_size, LANE)
    w3_p = jnp.zeros((H2, out_pad), f32).at[:, :out_size].set(
        params["w3"]).astype(bf16)
    b3_p = jnp.zeros((1, out_pad), f32).at[:, :out_size].set(params["b3"])

    # --- batch tiling ---------------------------------------------------------
    B, in_size = x.shape
    tb = _round_up(min(block_batch, _round_up(B, SUBLANE)), SUBLANE)
    b_pad = _round_up(B, tb)
    if b_pad != B:
        x = jnp.pad(x, ((0, b_pad - B), (0, 0)))
    grid = (b_pad // tb,)

    def resident(shape):
        # Weights / biases: same block for every grid step -> loaded once,
        # stay resident in VMEM.
        return pl.BlockSpec(shape, lambda i: (0, 0))

    out = pl.pallas_call(
        netmid_kernel,
        out_shape=jax.ShapeDtypeStruct((b_pad, out_pad), f32),
        grid=grid,
        in_specs=[
            pl.BlockSpec((tb, in_size), lambda i: (i, 0)),   # x: tiled over batch
            resident(w1.shape), resident(b1.shape),
            resident(w2_eff.shape), resident(b2_eff.shape),
            resident(w3_p.shape), resident(b3_p.shape),
        ],
        out_specs=pl.BlockSpec((tb, out_pad), lambda i: (i, 0)),
        compiler_params=pltpu.CompilerParams(
            dimension_semantics=("parallel",),        # shards tiles across TCs on v7x
            vmem_limit_bytes=32 * 1024 * 1024,        # well under v7x's 64 MiB VMEM
        ),
    )(x, w1, b1, w2_eff, b2_eff, w3_p, b3_p)

    return out[:B, :out_size]


def make_params(key, input_size, hidden1_size, hidden2_size, output_size,
                distribution_num):
    """Deterministic synthetic params (PyTorch nn.Linear init, stored pre-transposed)."""
    ks = jax.random.split(key, 6)
    f = jnp.float32

    def lin(kw, kb, fan_in, fan_out):
        bound = 1.0 / jnp.sqrt(fan_in)
        w = jax.random.uniform(kw, (fan_in, fan_out), f, -bound, bound)  # (in, out) == W.T
        b = jax.random.uniform(kb, (1, fan_out), f, -bound, bound)
        return w, b

    w1, b1 = lin(ks[0], ks[1], input_size, hidden1_size)
    w2, b2 = lin(ks[2], ks[3], hidden1_size, hidden2_size * distribution_num)
    w3, b3 = lin(ks[4], ks[5], hidden2_size, output_size)
    return dict(w1=w1, b1=b1, w2=w2, b2=b2, w3=w3, b3=b3)


def netmid_reference_f32(x, params, *, hidden2_size, distribution_num):
    """Pure-f32 reference matching the PyTorch forward exactly."""
    z1 = jax.nn.relu(x @ params["w1"] + params["b1"])
    z2_full = z1 @ params["w2"] + params["b2"]
    if distribution_num > 1:
        z2 = z2_full.reshape(-1, distribution_num, hidden2_size).sum(axis=1)
    else:
        z2 = z2_full
    z2 = jax.nn.relu(z2)
    return z2 @ params["w3"] + params["b3"]


def netmid_reference_mixed(x, params, *, hidden2_size, distribution_num):
    """Reference with the same bf16-into-MXU / f32-accumulate numerics as the kernel."""
    bf16 = jnp.bfloat16

    def mm(a, w):
        return jnp.dot(a.astype(bf16), w.astype(bf16),
                       preferred_element_type=jnp.float32)

    H1 = params["w2"].shape[0]
    w2_eff = params["w2"].reshape(H1, distribution_num, hidden2_size).sum(axis=1)
    b2_eff = params["b2"].reshape(1, distribution_num, hidden2_size).sum(axis=1)

    z1 = jax.nn.relu(mm(x, params["w1"]) + params["b1"])
    z2 = jax.nn.relu(mm(z1, w2_eff) + b2_eff)
    return mm(z2, params["w3"]) + params["b3"]


if __name__ == "__main__":
    input_size = 64
    hidden1_size = 32
    hidden2_size = 32
    output_size = 10
    distribution_num = 3

    key = jax.random.PRNGKey(0)
    kx1, kx2, kp = jax.random.split(key, 3)
    params = make_params(kp, input_size, hidden1_size, hidden2_size,
                         output_size, distribution_num)
    fwd = functools.partial(netmid_forward, hidden2_size=hidden2_size,
                            distribution_num=distribution_num)
    ref_mixed = functools.partial(netmid_reference_mixed,
                                  hidden2_size=hidden2_size,
                                  distribution_num=distribution_num)
    ref_f32 = functools.partial(netmid_reference_f32,
                                hidden2_size=hidden2_size,
                                distribution_num=distribution_num)

    # Case 1: small batch, single tile.
    x1 = jax.random.normal(kx1, (8, input_size), dtype=jnp.float32)
    out1 = jax.block_until_ready(fwd(x1, params))
    assert out1.shape == (8, output_size)
    assert jnp.allclose(out1, ref_mixed(x1, params), atol=2e-3, rtol=2e-3), \
        "mismatch vs mixed-precision reference (case 1)"
    assert jnp.allclose(out1, ref_f32(x1, params), atol=5e-2, rtol=5e-2), \
        "mismatch vs f32 reference (case 1)"

    # Case 2: non-multiple batch with a small tile -> exercises grid + padding.
    x2 = jax.random.normal(kx2, (40, input_size), dtype=jnp.float32)
    out2 = jax.block_until_ready(fwd(x2, params, block_batch=16))
    assert out2.shape == (40, output_size)
    assert jnp.allclose(out2, ref_mixed(x2, params), atol=2e-3, rtol=2e-3), \
        "mismatch vs mixed-precision reference (case 2)"
    assert jnp.allclose(out2, ref_f32(x2, params), atol=5e-2, rtol=5e-2), \
        "mismatch vs f32 reference (case 2)"

    print("KERNEL_OK")
</pallas_src>

<mosaic_0001>
module attributes {stable_mosaic.version = 11 : i64} {
  func.func @netmid_kernel(%arg0: i32, %arg1: memref<8x64xf32, #tpu.memory_space<vmem>>, %arg2: memref<64x32xbf16, #tpu.memory_space<vmem>>, %arg3: memref<1x32xf32, #tpu.memory_space<vmem>>, %arg4: memref<32x32xbf16, #tpu.memory_space<vmem>>, %arg5: memref<1x32xf32, #tpu.memory_space<vmem>>, %arg6: memref<32x128xbf16, #tpu.memory_space<vmem>>, %arg7: memref<1x128xf32, #tpu.memory_space<vmem>>, %arg8: memref<8x128xf32, #tpu.memory_space<vmem>>) attributes {dimension_semantics = [#tpu.dimension_semantics<parallel>], iteration_bounds = array<i64: 1>, scalar_prefetch = 0 : i64, scratch_operands = 0 : i64, tpu.core_type = #tpu.core_type<tc>, window_params = [{transform_indices = @transform_0, window_bounds = array<i64: 8, 64>}, {pipeline_mode = #tpu.pipeline_mode<synchronous>, transform_indices = @transform_1, window_bounds = array<i64: 64, 32>}, {pipeline_mode = #tpu.pipeline_mode<synchronous>, transform_indices = @transform_2, window_bounds = array<i64: 1, 32>}, {pipeline_mode = #tpu.pipeline_mode<synchronous>, transform_indices = @transform_3, window_bounds = array<i64: 32, 32>}, {pipeline_mode = #tpu.pipeline_mode<synchronous>, transform_indices = @transform_4, window_bounds = array<i64: 1, 32>}, {pipeline_mode = #tpu.pipeline_mode<synchronous>, transform_indices = @transform_5, window_bounds = array<i64: 32, 128>}, {pipeline_mode = #tpu.pipeline_mode<synchronous>, transform_indices = @transform_6, window_bounds = array<i64: 1, 128>}, {transform_indices = @transform_7, window_bounds = array<i64: 8, 128>}]} {
    %c0 = arith.constant 0 : index
    %c0_0 = arith.constant 0 : index
    %0 = vector.load %arg1[%c0, %c0_0] : memref<8x64xf32, #tpu.memory_space<vmem>>, vector<8x64xf32>
    %1 = arith.truncf %0 : vector<8x64xf32> to vector<8x64xbf16>
    %c0_1 = arith.constant 0 : index
    %c0_2 = arith.constant 0 : index
    %2 = vector.load %arg2[%c0_1, %c0_2] : memref<64x32xbf16, #tpu.memory_space<vmem>>, vector<64x32xbf16>
    %cst = arith.constant dense<0.000000e+00> : vector<8x32xf32>
    %3 = tpu.matmul %1, %2, %cst {dimension_numbers = #tpu.dot_dimension_numbers<[1], [0], [0], [1], [0, 0, 1, 1], [], []>} : vector<8x64xbf16>, vector<64x32xbf16>, vector<8x32xf32> -> vector<8x32xf32>
    %c0_3 = arith.constant 0 : index
    %c0_4 = arith.constant 0 : index
    %4 = vector.load %arg3[%c0_3, %c0_4] : memref<1x32xf32, #tpu.memory_space<vmem>>, vector<1x32xf32>
    %5 = vector.broadcast %4 : vector<1x32xf32> to vector<8x32xf32>
    %6 = arith.addf %3, %5 : vector<8x32xf32>
    %cst_5 = arith.constant 0.000000e+00 : f32
    %7 = vector.broadcast %cst_5 : f32 to vector<8x32xf32>
    %8 = arith.maximumf %6, %7 : vector<8x32xf32>
    %9 = arith.truncf %8 : vector<8x32xf32> to vector<8x32xbf16>
    %c0_6 = arith.constant 0 : index
    %c0_7 = arith.constant 0 : index
    %10 = vector.load %arg4[%c0_6, %c0_7] : memref<32x32xbf16, #tpu.memory_space<vmem>>, vector<32x32xbf16>
    %cst_8 = arith.constant dense<0.000000e+00> : vector<8x32xf32>
    %11 = tpu.matmul %9, %10, %cst_8 {dimension_numbers = #tpu.dot_dimension_numbers<[1], [0], [0], [1], [0, 0, 1, 1], [], []>} : vector<8x32xbf16>, vector<32x32xbf16>, vector<8x32xf32> -> vector<8x32xf32>
    %c0_9 = arith.constant 0 : index
    %c0_10 = arith.constant 0 : index
    %12 = vector.load %arg5[%c0_9, %c0_10] : memref<1x32xf32, #tpu.memory_space<vmem>>, vector<1x32xf32>
    %13 = vector.broadcast %12 : vector<1x32xf32> to vector<8x32xf32>
    %14 = arith.addf %11, %13 : vector<8x32xf32>
    %cst_11 = arith.constant 0.000000e+00 : f32
    %15 = vector.broadcast %cst_11 : f32 to vector<8x32xf32>
    %16 = arith.maximumf %14, %15 : vector<8x32xf32>
    %17 = arith.truncf %16 : vector<8x32xf32> to vector<8x32xbf16>
    %c0_12 = arith.constant 0 : index
    %c0_13 = arith.constant 0 : index
    %18 = vector.load %arg6[%c0_12, %c0_13] : memref<32x128xbf16, #tpu.memory_space<vmem>>, vector<32x128xbf16>
    %cst_14 = arith.constant dense<0.000000e+00> : vector<8x128xf32>
    %19 = tpu.matmul %17, %18, %cst_14 {dimension_numbers = #tpu.dot_dimension_numbers<[1], [0], [0], [1], [0, 0, 1, 1], [], []>} : vector<8x32xbf16>, vector<32x128xbf16>, vector<8x128xf32> -> vector<8x128xf32>
    %c0_15 = arith.constant 0 : index
    %c0_16 = arith.constant 0 : index
    %20 = vector.load %arg7[%c0_15, %c0_16] : memref<1x128xf32, #tpu.memory_space<vmem>>, vector<1x128xf32>
    %21 = vector.broadcast %20 : vector<1x128xf32> to vector<8x128xf32>
    %22 = arith.addf %19, %21 : vector<8x128xf32>
    %c0_17 = arith.constant 0 : index
    %c0_18 = arith.constant 0 : index
    %23 = vector.load %arg8[%c0_17, %c0_18] : memref<8x128xf32, #tpu.memory_space<vmem>>, vector<8x128xf32>
    tpu.vector_store %arg8[%c0_17, %c0_18], %22 {strides = array<i32>} : memref<8x128xf32, #tpu.memory_space<vmem>>, vector<8x128xf32>,
    return
  }
  func.func @transform_0(%arg0: i32) -> (i32, i32) {
    %c0_i32 = arith.constant 0 : i32
    %c0_i32_0 = arith.constant 0 : i32
    return %arg0, %c0_i32 : i32, i32
  }
  func.func @transform_1(%arg0: i32) -> (i32, i32) {
    %c0_i32 = arith.constant 0 : i32
    %c0_i32_0 = arith.constant 0 : i32
    %c0_i32_1 = arith.constant 0 : i32
    return %c0_i32, %c0_i32_0 : i32, i32
  }
  func.func @transform_2(%arg0: i32) -> (i32, i32) {
    %c0_i32 = arith.constant 0 : i32
    %c0_i32_0 = arith.constant 0 : i32
    %c0_i32_1 = arith.constant 0 : i32
    return %c0_i32, %c0_i32_0 : i32, i32
  }
  func.func @transform_3(%arg0: i32) -> (i32, i32) {
    %c0_i32 = arith.constant 0 : i32
    %c0_i32_0 = arith.constant 0 : i32
    %c0_i32_1 = arith.constant 0 : i32
    return %c0_i32, %c0_i32_0 : i32, i32
  }
  func.func @transform_4(%arg0: i32) -> (i32, i32) {
    %c0_i32 = arith.constant 0 : i32
    %c0_i32_0 = arith.constant 0 : i32
    %c0_i32_1 = arith.constant 0 : i32
    return %c0_i32, %c0_i32_0 : i32, i32
  }
  func.func @transform_5(%arg0: i32) -> (i32, i32) {
    %c0_i32 = arith.constant 0 : i32
    %c0_i32_0 = arith.constant 0 : i32
    %c0_i32_1 = arith.constant 0 : i32
    return %c0_i32, %c0_i32_0 : i32, i32
  }
  func.func @transform_6(%arg0: i32) -> (i32, i32) {
    %c0_i32 = arith.constant 0 : i32
    %c0_i32_0 = arith.constant 0 : i32
    %c0_i32_1 = arith.constant 0 : i32
    return %c0_i32, %c0_i32_0 : i32, i32
  }
  func.func @transform_7(%arg0: i32) -> (i32, i32) {
    %c0_i32 = arith.constant 0 : i32
    %c0_i32_0 = arith.constant 0 : i32
    return %arg0, %c0_i32 : i32, i32
  }
}

</mosaic_0001>

<llo_original>
// kernel: tpu_custom_call.1
$region0: #{tpu_custom_call.1}
  #allocation0 [shape = 'u32[]', space=smem, size = 0x4, offset = 0x4, fixed_abs, tag = 'smem constant byte address 0x4 - core index']
  #allocation1 [shape = 'u32[144,128]{1,0:T(1,128)}', space=vmem, size = 0x12000, scoped, tag = 'internal scratch']
  %s0 = inlined_call_operand.vmem [shape: f32[8,64], index: 0, kind: input, shape index: {}]
  %s1 = inlined_call_operand.vmem [shape: bf16[64,32], index: 1, kind: input, shape index: {}]
  %s2 = inlined_call_operand.vmem [shape: f32[1,32], index: 2, kind: input, shape index: {}]
  %s3 = inlined_call_operand.vmem [shape: bf16[32,32], index: 3, kind: input, shape index: {}]
  %s4 = inlined_call_operand.vmem [shape: f32[1,32], index: 4, kind: input, shape index: {}]
  %s5 = inlined_call_operand.vmem [shape: bf16[32,128], index: 5, kind: input, shape index: {}]
  %s6 = inlined_call_operand.vmem [shape: f32[1,128], index: 6, kind: input, shape index: {}]
  %s7 = inlined_call_operand.hbm [shape: f32[8,128], index: 7, kind: output, shape index: {}]
  %s8 = sld [smem:[#allocation0]]
  $region38: #{tpu_custom_call.1} parent=0
    _
  %s10 = ssub.s32 1, %s8
  %s11 = scalar_select 0, %s10, %s8
  $region1: #{tpu_custom_call.1} parent=0
    #allocation2 [shape = 'u8[4096]{0}', space=vmem, size = 0x1000, scoped, tag = 'output window, operand 0, single buffered']
    #allocation3 [shape = 's32[1]{0}', space=sflag, size = 0x4, scoped, tag = 'scoped memory for tpu_custom_call.1']
    %12 = vsyncpa [#allocation3], 0
    // Predicated region
    $region2: #{tpu_custom_call.1} parent=1 // pred_check
      _
    $region3: #{tpu_custom_call.1} parent=1 // pred_check_branch
      %14 = sbr.rel (0) target = $region5
    $region4: #{tpu_custom_call.1} parent=1 // pred_region
      _
    $region5: #{tpu_custom_call.1} parent=1 // pred_fallthru
      _
    // Predicated region
    $region6: #{tpu_custom_call.1} parent=1 // pred_check
      _
    $region7: #{tpu_custom_call.1} parent=1 // pred_check_branch
      %16 = sbr.rel (0) target = $region9
    $region8: #{tpu_custom_call.1} parent=1 // pred_region
      _
    $region9: #{tpu_custom_call.1} parent=1 // pred_fallthru
      _
    // Predicated region
    $region10: #{tpu_custom_call.1} parent=1 // pred_check
      _
    $region11: #{tpu_custom_call.1} parent=1 // pred_check_branch
      %18 = sbr.rel (0) target = $region13
    $region12: #{tpu_custom_call.1} parent=1 // pred_region
      _
    $region13: #{tpu_custom_call.1} parent=1 // pred_fallthru
      _
    // Predicated region
    $region14: #{tpu_custom_call.1} parent=1 // pred_check
      _
    $region15: #{tpu_custom_call.1} parent=1 // pred_check_branch
      %20 = sbr.rel (0) target = $region17
    $region16: #{tpu_custom_call.1} parent=1 // pred_region
      _
    $region17: #{tpu_custom_call.1} parent=1 // pred_fallthru
      _
    // Predicated region
    $region18: #{tpu_custom_call.1} parent=1 // pred_check
      _
    $region19: #{tpu_custom_call.1} parent=1 // pred_check_branch
      %22 = sbr.rel (0) target = $region21
    $region20: #{tpu_custom_call.1} parent=1 // pred_region
      _
    $region21: #{tpu_custom_call.1} parent=1 // pred_fallthru
      _
    // Predicated region
    $region22: #{tpu_custom_call.1} parent=1 // pred_check
      _
    $region23: #{tpu_custom_call.1} parent=1 // pred_check_branch
      %24 = sbr.rel (0) target = $region25
    $region24: #{tpu_custom_call.1} parent=1 // pred_region
      _
    $region25: #{tpu_custom_call.1} parent=1 // pred_fallthru
      _
    // Predicated region
    $region26: #{tpu_custom_call.1} parent=1 // pred_check
      _
    $region27: #{tpu_custom_call.1} parent=1 // pred_check_branch
      %26 = sbr.rel (0) target = $region29
    $region28: #{tpu_custom_call.1} parent=1 // pred_region
      _
    $region29: #{tpu_custom_call.1} parent=1 // pred_fallthru
      _
    %v28 = vld [vmem:[%s0] sm:$0xff]
    %v29 = vpack.c.bf16 %v28, %v28
    %v30 = vld [vmem:[%s1] sm:$0xf]
    %v31 = vld [vmem:[%s1 + $0x4] sm:$0xf]
    %v32 = vld [vmem:[%s1 + $0x8] sm:$0xf]
    %v33 = vld [vmem:[%s1 + $0xc] sm:$0xf]
    %v34 = vld [vmem:[%s1 + $0x10] sm:$0xf]
    %v35 = vld [vmem:[%s1 + $0x14] sm:$0xf]
    %v36 = vld [vmem:[%s1 + $0x18] sm:$0xf]
    %v37 = vld [vmem:[%s1 + $0x1c] sm:$0xf]
    %v38 = vld [vmem:[%s2] sm:$0x1]
    %v40 = vlaneseq
    %v41 = vshrl.u32 %v40, 7
    %v42 = vsub.s32 0, %v41
    %v43 = vrot.slane %v38, %v42
    %v53 = vunpack.c.l.b16 %v30
    %v54 = vunpack.c.l.b16 %v31
    %v55 = vunpack.c.l.b16 %v32
    %v56 = vunpack.c.l.b16 %v33
    %v57 = vunpack.c.l.b16 %v34
    %v58 = vunpack.c.l.b16 %v35
    %v59 = vunpack.c.l.b16 %v36
    %v60 = vunpack.c.l.b16 %v37
    %v61 = vpack.c.b16 %v54, %v53
    %v62 = vpack.c.b16 %v56, %v55
    %v63 = vpack.c.b16 %v58, %v57
    %v64 = vpack.c.b16 %v60, %v59
    %vm69 = vcmask 523264
    %v71 = vsel %vm69, %v29, 0
    %73 = vmatprep.subr.bf16.mxu0 0
    %74 = vmatpush1.bf16.msra.mxu0 0
    %75 = vmatprep.subr.bf16.mxu0 0
    %76 = vmatpush1.bf16.msra.mxu0 0
    %77 = vmatprep.subr.bf16.mxu0 0
    %78 = vmatpush1.bf16.msra.mxu0 0
    %79 = vmatprep.subr.bf16.mxu0 0
    %80 = vmatpush1.bf16.msra.mxu0 0
    %81 = vmatprep.subr.bf16.mxu0 0
    %82 = vmatpush1.bf16.msra.mxu0 %v64
    %83 = vmatprep.subr.bf16.mxu0 0
    %84 = vmatpush1.bf16.msra.mxu0 %v63
    %85 = vmatprep.subr.bf16.mxu0 0
    %86 = vmatpush1.bf16.msra.mxu0 %v62
    %87 = vmatprep.subr.bf16.mxu0 0
    %88 = vmatpush1.bf16.msra.mxu0 %v61
    %89 = vmatprep.subr.bf16.mxu0 0
    %90 = vmatpush2.bf16.msra.mxu0 0
    %91 = vmatprep.subr.bf16.mxu0 0
    %92 = vmatpush2.bf16.msra.mxu0 0
    %93 = vmatprep.subr.bf16.mxu0 0
    %94 = vmatpush2.bf16.msra.mxu0 0
    %95 = vmatprep.subr.bf16.mxu0 0
    %96 = vmatpush2.bf16.msra.mxu0 0
    %97 = vmatprep.subr.bf16.mxu0 0
    %98 = vmatpush2.bf16.msra.mxu0 0
    %99 = vmatprep.subr.bf16.mxu0 0
    %100 = vmatpush2.bf16.msra.mxu0 0
    %101 = vmatprep.subr.bf16.mxu0 0
    %102 = vmatpush2.bf16.msra.mxu0 0
    %103 = vmatprep.subr.bf16.mxu0 0
    %104 = vmatpush2.bf16.msra.mxu0 0
    %105 = vmatprep.mubr.bf16.mxu0 0
    %106 = vmatmul.mubr.bf16.gmra.mxu0 %v71
    %v107 = vpop.f32.mrf.mxu0
    %v108 = vadd.f32 %v43, %v107
    %v109 = vpop.f32.mrf.mxu0
    %v110 = vpop.f32.mrf.mxu0
    %v111 = vpop.f32.mrf.mxu0
    %112 = vdwg.mxu0
    %v113 = vmax.f32 %v108, 0.0
    %v114 = vpack.c.bf16 %v113, %v113
    %v115 = vld [vmem:[%s3] sm:$0xf]
    %v116 = vld [vmem:[%s3 + $0x4] sm:$0xf]
    %v117 = vld [vmem:[%s3 + $0x8] sm:$0xf]
    %v118 = vld [vmem:[%s3 + $0xc] sm:$0xf]
    %v119 = vld [vmem:[%s4] sm:$0x1]
    %v121 = vlaneseq
    %v122 = vshrl.u32 %v121, 7
    %v123 = vsub.s32 0, %v122
    %v124 = vrot.slane %v119, %v123
    %v130 = vunpack.c.l.b16 %v115
    %v131 = vunpack.c.l.b16 %v116
    %v132 = vunpack.c.l.b16 %v117
    %v133 = vunpack.c.l.b16 %v118
    %v134 = vpack.c.b16 %v131, %v130
    %v135 = vpack.c.b16 %v133, %v132
    %vm138 = vcmask 261120
    %v140 = vsel %vm138, %v114, 0
    %142 = vmatprep.subr.bf16.mxu0 0
    %143 = vmatpush1.bf16.msra.mxu0 0
    %144 = vmatprep.subr.bf16.mxu0 0
    %145 = vmatpush1.bf16.msra.mxu0 0
    %146 = vmatprep.subr.bf16.mxu0 0
    %147 = vmatpush1.bf16.msra.mxu0 0
    %148 = vmatprep.subr.bf16.mxu0 0
    %149 = vmatpush1.bf16.msra.mxu0 0
    %150 = vmatprep.subr.bf16.mxu0 0
    %151 = vmatpush1.bf16.msra.mxu0 0
    %152 = vmatprep.subr.bf16.mxu0 0
    %153 = vmatpush1.bf16.msra.mxu0 0
    %154 = vmatprep.subr.bf16.mxu0 0
    %155 = vmatpush1.bf16.msra.mxu0 %v135
    %156 = vmatprep.subr.bf16.mxu0 0
    %157 = vmatpush1.bf16.msra.mxu0 %v134
    %158 = vmatprep.subr.bf16.mxu0 0
    %159 = vmatpush2.bf16.msra.mxu0 0
    %160 = vmatprep.subr.bf16.mxu0 0
    %161 = vmatpush2.bf16.msra.mxu0 0
    %162 = vmatprep.subr.bf16.mxu0 0
    %163 = vmatpush2.bf16.msra.mxu0 0
    %164 = vmatprep.subr.bf16.mxu0 0
    %165 = vmatpush2.bf16.msra.mxu0 0
    %166 = vmatprep.subr.bf16.mxu0 0
    %167 = vmatpush2.bf16.msra.mxu0 0
    %168 = vmatprep.subr.bf16.mxu0 0
    %169 = vmatpush2.bf16.msra.mxu0 0
    %170 = vmatprep.subr.bf16.mxu0 0
    %171 = vmatpush2.bf16.msra.mxu0 0
    %172 = vmatprep.subr.bf16.mxu0 0
    %173 = vmatpush2.bf16.msra.mxu0 0
    %174 = vmatprep.mubr.bf16.mxu0 0
    %175 = vmatmul.mubr.bf16.gmra.mxu0 %v140
    %v176 = vpop.f32.mrf.mxu0
    %v177 = vadd.f32 %v124, %v176
    %v178 = vpop.f32.mrf.mxu0
    %v179 = vpop.f32.mrf.mxu0
    %v180 = vpop.f32.mrf.mxu0
    %181 = vdwg.mxu0
    %v182 = vmax.f32 %v177, 0.0
    %v183 = vpack.c.bf16 %v182, %v182
    %v184 = vld [vmem:[%s5] sm:$0xf]
    %v185 = vld [vmem:[%s5 + $0x4] sm:$0xf]
    %v186 = vld [vmem:[%s5 + $0x8] sm:$0xf]
    %v187 = vld [vmem:[%s5 + $0xc] sm:$0xf]
    %v188 = vld [vmem:[%s6] sm:$0x1]
    %v190 = vlaneseq
    %v191 = vshrl.u32 %v190, 7
    %v192 = vsub.s32 0, %v191
    %v193 = vrot.slane %v188, %v192
    %v199 = vunpack.c.l.b16 %v184
    %v200 = vunpack.c.l.b16 %v185
    %v201 = vunpack.c.l.b16 %v186
    %v202 = vunpack.c.l.b16 %v187
    %v203 = vpack.c.b16 %v200, %v199
    %v204 = vpack.c.b16 %v202, %v201
    %v208 = vsel %vm138, %v183, 0
    %210 = vmatprep.subr.bf16.mxu0 0
    %211 = vmatpush1.bf16.msra.mxu0 0
    %212 = vmatprep.subr.bf16.mxu0 0
    %213 = vmatpush1.bf16.msra.mxu0 0
    %214 = vmatprep.subr.bf16.mxu0 0
    %215 = vmatpush1.bf16.msra.mxu0 0
    %216 = vmatprep.subr.bf16.mxu0 0
    %217 = vmatpush1.bf16.msra.mxu0 0
    %218 = vmatprep.subr.bf16.mxu0 0
    %219 = vmatpush1.bf16.msra.mxu0 0
    %220 = vmatprep.subr.bf16.mxu0 0
    %221 = vmatpush1.bf16.msra.mxu0 0
    %222 = vmatprep.subr.bf16.mxu0 0
    %223 = vmatpush1.bf16.msra.mxu0 %v204
    %224 = vmatprep.subr.bf16.mxu0 0
    %225 = vmatpush1.bf16.msra.mxu0 %v203
    %226 = vmatprep.subr.bf16.mxu0 0
    %227 = vmatpush2.bf16.msra.mxu0 0
    %228 = vmatprep.subr.bf16.mxu0 0
    %229 = vmatpush2.bf16.msra.mxu0 0
    %230 = vmatprep.subr.bf16.mxu0 0
    %231 = vmatpush2.bf16.msra.mxu0 0
    %232 = vmatprep.subr.bf16.mxu0 0
    %233 = vmatpush2.bf16.msra.mxu0 0
    %234 = vmatprep.subr.bf16.mxu0 0
    %235 = vmatpush2.bf16.msra.mxu0 0
    %236 = vmatprep.subr.bf16.mxu0 0
    %237 = vmatpush2.bf16.msra.mxu0 0
    %238 = vmatprep.subr.bf16.mxu0 0
    %239 = vmatpush2.bf16.msra.mxu0 0
    %240 = vmatprep.subr.bf16.mxu0 0
    %241 = vmatpush2.bf16.msra.mxu0 0
    %242 = vmatprep.mubr.bf16.mxu0 0
    %243 = vmatmul.mubr.bf16.gmra.mxu0 %v208
    %v244 = vpop.f32.mrf.mxu0
    %v245 = vadd.f32 %v193, %v244
    %v246 = vpop.f32.mrf.mxu0
    %v247 = vpop.f32.mrf.mxu0
    %v248 = vpop.f32.mrf.mxu0
    %249 = vdwg.mxu0
    %250 = vst [vmem:[#allocation2] sm:$0xff] %v245
    // Predicated region
    $region30: #{tpu_custom_call.1} parent=1 // pred_check
      _
    $region31: #{tpu_custom_call.1} parent=1 // pred_check_branch
      %252 = sbr.rel (0) target = $region33
    $region32: #{tpu_custom_call.1} parent=1 // pred_region
      %s254 = ssub.s32 128, 128
      %255 = vsyncadd [#allocation3], %s254
      %s257 = sshll.u32 [#allocation2], 4
      %s258 = int_to_ptr.vmem [resolvable:$true] %s257
      %260 = dma.vmem_to_hbm [thread:$0]  %s258, 128, %s7, [#allocation3]
    $region33: #{tpu_custom_call.1} parent=1 // pred_fallthru
      _
    // Predicated region
    $region34: #{tpu_custom_call.1} parent=1 // pred_check
      _
    $region35: #{tpu_custom_call.1} parent=1 // pred_check_branch
      %262 = sbr.rel (0) target = $region37
    $region36: #{tpu_custom_call.1} parent=1 // pred_region
      %263 = dma.done [#allocation3], 128
    $region37: #{tpu_custom_call.1} parent=1 // pred_fallthru
      _
    %264 = vsyncpa [#allocation3], 1

</llo_original>
